<compile_context>
chip_gen: v6e
topology: v6e:2x2x1
jax: 0.10.0
libtpu: 0.0.40
codegen_flags: <defaults>
</compile_context>

<pallas_src>
import functools
import math

import jax
import jax.numpy as jnp
from jax.experimental import pallas as pl
from jax.experimental.pallas import tpu as pltpu


# --------------------------------------------------------------------------- kernel
def _rwce_partial_kernel(p_ref, t_ref, a_ref, b_ref, n_ref, *,
                         rows_total, tile_rows, split, steps_per_split):
    """Per-(class, split) streaming partial sums for the reweighted BCE loss.

    p_ref, t_ref : (B, tile_rows, LC) input tiles (any float dtype; upcast here).
    a_ref, b_ref, n_ref : (1, LC) f32 resident output blocks used as accumulators.
    """
    s = pl.program_id(1)

    @pl.when(s == 0)
    def _init():
        a_ref[...] = jnp.zeros_like(a_ref)
        b_ref[...] = jnp.zeros_like(b_ref)
        n_ref[...] = jnp.zeros_like(n_ref)

    pred = p_ref[...].astype(jnp.float32)
    tgt = t_ref[...].astype(jnp.float32)

    # Numerically stable softplus(-pred): max(-x, 0) + log(1 + exp(-|x|))  (1 exp + 1 log).
    sp = jnp.maximum(-pred, 0.0) + jnp.log(1.0 + jnp.exp(-jnp.abs(pred)))
    base = pred - pred * tgt + sp            # pos_weight-independent part
    wpart = tgt * sp                         # multiplied by (pos_weight - 1) later

    if rows_total % tile_rows != 0:
        # Ragged last row-block: zero the out-of-range rows (their VMEM content is undefined).
        if split == 1:
            row_block = s
        else:
            g = pl.program_id(0)
            row_block = (g % split) * steps_per_split + s
        rows_left = rows_total - row_block * tile_rows
        row_ids = jax.lax.broadcasted_iota(jnp.int32, pred.shape, dimension=1)
        valid = row_ids < rows_left
        base = jnp.where(valid, base, 0.0)
        wpart = jnp.where(valid, wpart, 0.0)
        tgt = jnp.where(valid, tgt, 0.0)

    def psum(x):
        # Batch-axis vreg adds + sublane fold -> (1, LC); the cross-lane reduction is
        # deferred to the tiny XLA combine in the wrapper (no per-step scalarization).
        return jnp.sum(jnp.sum(x, axis=0), axis=0, keepdims=True)

    a_ref[...] = a_ref[...] + psum(base)
    b_ref[...] = b_ref[...] + psum(wpart)
    n_ref[...] = n_ref[...] + psum(tgt)


# --------------------------------------------------------------------------- helpers
def _largest_lane_dim(hw, cap=1024):
    """Largest multiple of 128 dividing hw (and <= cap).  Requires hw % 128 == 0."""
    best = 128
    m = 256
    while m <= min(hw, cap):
        if hw % m == 0:
            best = m
        m += 128
    return best


def _choose_tile_rows(B, R, lc, pair_bytes, budget_bytes):
    """Largest row tile fitting the budget: 2 pipeline buffers x (pred+tgt) + f32 temps."""
    per_row = max(1, B * lc * (2 * pair_bytes + 16))
    max_rows = max(1, budget_bytes // per_row)
    if max_rows >= R:
        return R                                   # whole class slice per tile (full-dim block)
    return max(8, (int(max_rows) // 8) * 8)        # multiple of 8 keeps the (8,128) rule


# --------------------------------------------------------------------------- wrapper
def reweighted_cross_entropy_loss(preds, targets, *, tile_rows=None):
    """preds, targets: [B, K, H, W]; any float dtype (targets may be narrow — upcast in-kernel).
    Returns shape (1,) float32 loss matching the torch module."""
    B, K, H, W = preds.shape
    num_total = B * H * W
    hw = H * W

    # (1) Lane-dense spatial fold: last axis a multiple of 128 whenever possible.
    if hw % 128 == 0:
        lc = _largest_lane_dim(hw)
        R = hw // lc
        p = preds.reshape(B, K, R, lc)
        t = targets.reshape(B, K, R, lc)
    else:
        lc, R = W, H                               # fallback: full-W lanes (full-dim block legal)
        p, t = preds, targets

    # (2) Generation-aware VMEM budget (v7x: 64 MiB/TC, v5e/v6e: 128 MiB).
    try:
        vmem_cap = int(pltpu.get_tpu_info().vmem_capacity_bytes)
    except Exception:
        vmem_cap = 64 << 20                        # conservative default, safe everywhere
    input_budget = vmem_cap // 4
    vmem_limit = vmem_cap // 2

    pair_bytes = preds.dtype.itemsize + targets.dtype.itemsize
    if tile_rows is not None:
        tr = max(1, int(tile_rows))
    else:
        tr = _choose_tile_rows(B, R, lc, pair_bytes, input_budget)
    tr = min(tr, R)
    if tr < R and tr % 8 != 0:                     # partial blocks must keep the sublane rule
        tr = min(R, max(8, (tr // 8) * 8))

    nb = -(-R // tr)                               # number of row blocks (ceil)

    # (3) v7x megacore balance: split the spatial range across two parallel grid entries
    #     when there is a single class (pos_weight combine already lives in the wrapper).
    split = 2 if (K == 1 and nb >= 2 and nb % 2 == 0) else 1
    steps = nb // split
    G = K * split

    if split == 1:
        def in_map(g, s):
            return (0, g, s, 0)
    else:
        def in_map(g, s):
            return (0, g // split, (g % split) * steps + s, 0)

    kernel = functools.partial(
        _rwce_partial_kernel,
        rows_total=R, tile_rows=tr, split=split, steps_per_split=steps)

    out_sd = jax.ShapeDtypeStruct((G, 1, lc), jnp.float32)
    out_spec = pl.BlockSpec((None, 1, lc), lambda g, s: (g, 0, 0))

    a_part, b_part, n_part = pl.pallas_call(
        kernel,
        out_shape=(out_sd, out_sd, out_sd),
        grid_spec=pltpu.PrefetchScalarGridSpec(
            num_scalar_prefetch=0,
            grid=(G, steps),
            in_specs=[
                pl.BlockSpec((B, None, tr, lc), in_map),
                pl.BlockSpec((B, None, tr, lc), in_map),
            ],
            out_specs=(out_spec, out_spec, out_spec),
        ),
        compiler_params=pltpu.CompilerParams(
            dimension_semantics=("parallel", "arbitrary"),
            vmem_limit_bytes=int(vmem_limit),
        ),
    )(p, t)

    # (4) Tiny K-sized combine: cross-lane reduce, pos_weight, per-class mean, class mean.
    a_k = a_part.reshape(K, -1).sum(axis=1)
    b_k = b_part.reshape(K, -1).sum(axis=1)
    pos_k = n_part.reshape(K, -1).sum(axis=1)

    nt = jnp.float32(num_total)
    ratio = (nt - pos_k) / jnp.maximum(pos_k, 1e-30)
    pos_w = jnp.where(pos_k > 0.0, ratio, nt)      # num_pos == 0 -> clamps to num_total
    pos_w = jnp.clip(pos_w, 1.0, nt)
    loss_k = (a_k + (pos_w - 1.0) * b_k) / nt
    return (jnp.sum(loss_k) / K).reshape(1).astype(jnp.float32)


# --------------------------------------------------------------------------- reference
def _reference(preds, targets):
    """Pure-JAX port of the torch module (same 3-exp formulation) for validation."""
    B, K, H, W = preds.shape
    num_total = float(B * H * W)
    total = jnp.zeros((), jnp.float32)
    for i in range(K):
        pred = preds[:, i].astype(jnp.float32)
        target = targets[:, i].astype(jnp.float32)
        num_pos = jnp.sum(target)
        num_neg = num_total - num_pos
        pos_weight = jnp.clip(num_neg / num_pos, 1.0, num_total)
        max_val = jnp.maximum(-pred, 0.0)
        log_weight = 1.0 + (pos_weight - 1.0) * target
        loss = pred - pred * target + log_weight * (
            max_val + jnp.log(jnp.exp(-max_val) + jnp.exp(-pred - max_val)))
        total = total + jnp.mean(loss)
    return (total / K).reshape(1)


if __name__ == "__main__":
    key = jax.random.PRNGKey(0)

    def make_case(k, shape, p_dtype, t_dtype):
        k1, k2 = jax.random.split(k)
        preds = jax.random.uniform(k1, shape, dtype=jnp.float32).astype(p_dtype)   # [0, 1]
        targets = (jax.random.uniform(k2, shape) > 0.8).astype(t_dtype)            # {0, 1}
        return preds, targets

    cases = [
        # (shape,             preds dtype,   targets dtype, tile_rows override)
        ((2, 4, 16, 16),      jnp.float32,   jnp.float32,   None),  # lane-dense Lc=256, single step
        ((1, 1, 256, 128),    jnp.float32,   jnp.float32,   8),     # K=1 -> 2-way split + multi-step accum
        ((1, 2, 96, 128),     jnp.bfloat16,  jnp.bfloat16,  8),     # ragged last row tile + narrow dtypes
        ((2, 2, 10, 12),      jnp.float32,   jnp.float32,   None),  # H*W % 128 != 0 fallback layout
    ]

    for idx, (shape, pd, td, tr) in enumerate(cases):
        key, ck = jax.random.split(key)
        preds, targets = make_case(ck, shape, pd, td)
        loss = jax.block_until_ready(
            reweighted_cross_entropy_loss(preds, targets, tile_rows=tr))
        ref = jax.block_until_ready(_reference(preds, targets))
        assert loss.shape == (1,)
        assert jnp.allclose(loss, ref, rtol=1e-4, atol=1e-5), (idx, loss, ref)

    print("KERNEL_OK")
</pallas_src>

<mosaic_0001>
module attributes {stable_mosaic.version = 11 : i64} {
  func.func @_rwce_partial_kernel(%arg0: i32, %arg1: i32, %arg2: memref<2x1x1x256xf32, #tpu.memory_space<vmem>>, %arg3: memref<2x1x1x256xf32, #tpu.memory_space<vmem>>, %arg4: memref<1x1x256xf32, #tpu.memory_space<vmem>>, %arg5: memref<1x1x256xf32, #tpu.memory_space<vmem>>, %arg6: memref<1x1x256xf32, #tpu.memory_space<vmem>>) attributes {dimension_semantics = [#tpu.dimension_semantics<parallel>, #tpu.dimension_semantics<arbitrary>], iteration_bounds = array<i64: 4, 1>, scalar_prefetch = 0 : i64, scratch_operands = 0 : i64, tpu.core_type = #tpu.core_type<tc>, window_params = [{transform_indices = @transform_0, window_bounds = array<i64: 2, 1, 1, 256>}, {transform_indices = @transform_1, window_bounds = array<i64: 2, 1, 1, 256>}, {transform_indices = @transform_2, window_bounds = array<i64: 1, 1, 256>}, {transform_indices = @transform_3, window_bounds = array<i64: 1, 1, 256>}, {transform_indices = @transform_4, window_bounds = array<i64: 1, 1, 256>}]} {
    %c0_i32 = arith.constant 0 : i32
    %0 = arith.cmpi eq, %arg1, %c0_i32 : i32
    %1 = arith.extui %0 : i1 to i32
    %c0_i32_0 = arith.constant 0 : i32
    %2 = arith.cmpi ne, %1, %c0_i32_0 : i32
    scf.if %2 {
      %cst_35 = arith.constant 0.000000e+00 : f32
      %50 = vector.broadcast %cst_35 : f32 to vector<1x256xf32>
      %c0_36 = arith.constant 0 : index
      %c0_37 = arith.constant 0 : index
      %c0_38 = arith.constant 0 : index
      %51 = vector.load %arg4[%c0_36, %c0_37, %c0_38] : memref<1x1x256xf32, #tpu.memory_space<vmem>>, vector<1x1x256xf32>
      %52 = vector.shape_cast %51 : vector<1x1x256xf32> to vector<1x256xf32>
      %53 = vector.shape_cast %50 : vector<1x256xf32> to vector<1x1x256xf32>
      tpu.vector_store %arg4[%c0_36, %c0_37, %c0_38], %53 {strides = array<i32>} : memref<1x1x256xf32, #tpu.memory_space<vmem>>, vector<1x1x256xf32>,
      %cst_39 = arith.constant 0.000000e+00 : f32
      %54 = vector.broadcast %cst_39 : f32 to vector<1x256xf32>
      %c0_40 = arith.constant 0 : index
      %c0_41 = arith.constant 0 : index
      %c0_42 = arith.constant 0 : index
      %55 = vector.load %arg5[%c0_40, %c0_41, %c0_42] : memref<1x1x256xf32, #tpu.memory_space<vmem>>, vector<1x1x256xf32>
      %56 = vector.shape_cast %55 : vector<1x1x256xf32> to vector<1x256xf32>
      %57 = vector.shape_cast %54 : vector<1x256xf32> to vector<1x1x256xf32>
      tpu.vector_store %arg5[%c0_40, %c0_41, %c0_42], %57 {strides = array<i32>} : memref<1x1x256xf32, #tpu.memory_space<vmem>>, vector<1x1x256xf32>,
      %cst_43 = arith.constant 0.000000e+00 : f32
      %58 = vector.broadcast %cst_43 : f32 to vector<1x256xf32>
      %c0_44 = arith.constant 0 : index
      %c0_45 = arith.constant 0 : index
      %c0_46 = arith.constant 0 : index
      %59 = vector.load %arg6[%c0_44, %c0_45, %c0_46] : memref<1x1x256xf32, #tpu.memory_space<vmem>>, vector<1x1x256xf32>
      %60 = vector.shape_cast %59 : vector<1x1x256xf32> to vector<1x256xf32>
      %61 = vector.shape_cast %58 : vector<1x256xf32> to vector<1x1x256xf32>
      tpu.vector_store %arg6[%c0_44, %c0_45, %c0_46], %61 {strides = array<i32>} : memref<1x1x256xf32, #tpu.memory_space<vmem>>, vector<1x1x256xf32>,
    } else {
    }
    %c0 = arith.constant 0 : index
    %c0_1 = arith.constant 0 : index
    %c0_2 = arith.constant 0 : index
    %c0_3 = arith.constant 0 : index
    %3 = vector.load %arg2[%c0, %c0_1, %c0_2, %c0_3] : memref<2x1x1x256xf32, #tpu.memory_space<vmem>>, vector<2x1x1x256xf32>
    %4 = vector.shape_cast %3 : vector<2x1x1x256xf32> to vector<2x1x256xf32>
    %c0_4 = arith.constant 0 : index
    %c0_5 = arith.constant 0 : index
    %c0_6 = arith.constant 0 : index
    %c0_7 = arith.constant 0 : index
    %5 = vector.load %arg3[%c0_4, %c0_5, %c0_6, %c0_7] : memref<2x1x1x256xf32, #tpu.memory_space<vmem>>, vector<2x1x1x256xf32>
    %6 = vector.shape_cast %5 : vector<2x1x1x256xf32> to vector<2x1x256xf32>
    %cst = arith.constant 0.000000e+00 : f32
    %7 = vector.broadcast %cst : f32 to vector<2x1x256xf32>
    %8 = arith.subf %7, %4 : vector<2x1x256xf32>
    %cst_8 = arith.constant 0.000000e+00 : f32
    %9 = vector.broadcast %cst_8 : f32 to vector<2x1x256xf32>
    %10 = arith.maximumf %8, %9 : vector<2x1x256xf32>
    %11 = math.absf %4 : vector<2x1x256xf32>
    %cst_9 = arith.constant 0.000000e+00 : f32
    %12 = vector.broadcast %cst_9 : f32 to vector<2x1x256xf32>
    %13 = arith.subf %12, %11 : vector<2x1x256xf32>
    %14 = math.exp %13 : vector<2x1x256xf32>
    %cst_10 = arith.constant 1.000000e+00 : f32
    %15 = vector.broadcast %cst_10 : f32 to vector<2x1x256xf32>
    %16 = arith.addf %15, %14 : vector<2x1x256xf32>
    %17 = math.log %16 : vector<2x1x256xf32>
    %18 = arith.addf %10, %17 : vector<2x1x256xf32>
    %19 = arith.mulf %4, %6 : vector<2x1x256xf32>
    %20 = arith.subf %4, %19 : vector<2x1x256xf32>
    %21 = arith.addf %20, %18 : vector<2x1x256xf32>
    %22 = arith.mulf %6, %18 : vector<2x1x256xf32>
    %c0_11 = arith.constant 0 : index
    %c0_12 = arith.constant 0 : index
    %c0_13 = arith.constant 0 : index
    %23 = vector.load %arg4[%c0_11, %c0_12, %c0_13] : memref<1x1x256xf32, #tpu.memory_space<vmem>>, vector<1x1x256xf32>
    %24 = vector.shape_cast %23 : vector<1x1x256xf32> to vector<1x256xf32>
    %cst_14 = arith.constant dense<0.000000e+00> : vector<1x256xf32>
    %25 = vector.multi_reduction <add>, %21, %cst_14 [0] : vector<2x1x256xf32> to vector<1x256xf32>
    %cst_15 = arith.constant dense<0.000000e+00> : vector<256xf32>
    %26 = vector.multi_reduction <add>, %25, %cst_15 [0] : vector<1x256xf32> to vector<256xf32>
    %27 = vector.shape_cast %26 : vector<256xf32> to vector<1x256xf32>
    %28 = arith.addf %24, %27 : vector<1x256xf32>
    %c0_16 = arith.constant 0 : index
    %c0_17 = arith.constant 0 : index
    %c0_18 = arith.constant 0 : index
    %29 = vector.load %arg4[%c0_16, %c0_17, %c0_18] : memref<1x1x256xf32, #tpu.memory_space<vmem>>, vector<1x1x256xf32>
    %30 = vector.shape_cast %29 : vector<1x1x256xf32> to vector<1x256xf32>
    %31 = vector.shape_cast %28 : vector<1x256xf32> to vector<1x1x256xf32>
    tpu.vector_store %arg4[%c0_16, %c0_17, %c0_18], %31 {strides = array<i32>} : memref<1x1x256xf32, #tpu.memory_space<vmem>>, vector<1x1x256xf32>,
    %c0_19 = arith.constant 0 : index
    %c0_20 = arith.constant 0 : index
    %c0_21 = arith.constant 0 : index
    %32 = vector.load %arg5[%c0_19, %c0_20, %c0_21] : memref<1x1x256xf32, #tpu.memory_space<vmem>>, vector<1x1x256xf32>
    %33 = vector.shape_cast %32 : vector<1x1x256xf32> to vector<1x256xf32>
    %cst_22 = arith.constant dense<0.000000e+00> : vector<1x256xf32>
    %34 = vector.multi_reduction <add>, %22, %cst_22 [0] : vector<2x1x256xf32> to vector<1x256xf32>
    %cst_23 = arith.constant dense<0.000000e+00> : vector<256xf32>
    %35 = vector.multi_reduction <add>, %34, %cst_23 [0] : vector<1x256xf32> to vector<256xf32>
    %36 = vector.shape_cast %35 : vector<256xf32> to vector<1x256xf32>
    %37 = arith.addf %33, %36 : vector<1x256xf32>
    %c0_24 = arith.constant 0 : index
    %c0_25 = arith.constant 0 : index
    %c0_26 = arith.constant 0 : index
    %38 = vector.load %arg5[%c0_24, %c0_25, %c0_26] : memref<1x1x256xf32, #tpu.memory_space<vmem>>, vector<1x1x256xf32>
    %39 = vector.shape_cast %38 : vector<1x1x256xf32> to vector<1x256xf32>
    %40 = vector.shape_cast %37 : vector<1x256xf32> to vector<1x1x256xf32>
    tpu.vector_store %arg5[%c0_24, %c0_25, %c0_26], %40 {strides = array<i32>} : memref<1x1x256xf32, #tpu.memory_space<vmem>>, vector<1x1x256xf32>,
    %c0_27 = arith.constant 0 : index
    %c0_28 = arith.constant 0 : index
    %c0_29 = arith.constant 0 : index
    %41 = vector.load %arg6[%c0_27, %c0_28, %c0_29] : memref<1x1x256xf32, #tpu.memory_space<vmem>>, vector<1x1x256xf32>
    %42 = vector.shape_cast %41 : vector<1x1x256xf32> to vector<1x256xf32>
    %cst_30 = arith.constant dense<0.000000e+00> : vector<1x256xf32>
    %43 = vector.multi_reduction <add>, %6, %cst_30 [0] : vector<2x1x256xf32> to vector<1x256xf32>
    %cst_31 = arith.constant dense<0.000000e+00> : vector<256xf32>
    %44 = vector.multi_reduction <add>, %43, %cst_31 [0] : vector<1x256xf32> to vector<256xf32>
    %45 = vector.shape_cast %44 : vector<256xf32> to vector<1x256xf32>
    %46 = arith.addf %42, %45 : vector<1x256xf32>
    %c0_32 = arith.constant 0 : index
    %c0_33 = arith.constant 0 : index
    %c0_34 = arith.constant 0 : index
    %47 = vector.load %arg6[%c0_32, %c0_33, %c0_34] : memref<1x1x256xf32, #tpu.memory_space<vmem>>, vector<1x1x256xf32>
    %48 = vector.shape_cast %47 : vector<1x1x256xf32> to vector<1x256xf32>
    %49 = vector.shape_cast %46 : vector<1x256xf32> to vector<1x1x256xf32>
    tpu.vector_store %arg6[%c0_32, %c0_33, %c0_34], %49 {strides = array<i32>} : memref<1x1x256xf32, #tpu.memory_space<vmem>>, vector<1x1x256xf32>,
    return
  }
  func.func @transform_0(%arg0: i32, %arg1: i32) -> (i32, i32, i32, i32) {
    %c0_i32 = arith.constant 0 : i32
    %c0_i32_0 = arith.constant 0 : i32
    %c0_i32_1 = arith.constant 0 : i32
    return %c0_i32, %arg0, %arg1, %c0_i32_0 : i32, i32, i32, i32
  }
  func.func @transform_1(%arg0: i32, %arg1: i32) -> (i32, i32, i32, i32) {
    %c0_i32 = arith.constant 0 : i32
    %c0_i32_0 = arith.constant 0 : i32
    %c0_i32_1 = arith.constant 0 : i32
    return %c0_i32, %arg0, %arg1, %c0_i32_0 : i32, i32, i32, i32
  }
  func.func @transform_2(%arg0: i32, %arg1: i32) -> (i32, i32, i32) {
    %c0_i32 = arith.constant 0 : i32
    %c0_i32_0 = arith.constant 0 : i32
    %c0_i32_1 = arith.constant 0 : i32
    return %arg0, %c0_i32, %c0_i32_0 : i32, i32, i32
  }
  func.func @transform_3(%arg0: i32, %arg1: i32) -> (i32, i32, i32) {
    %c0_i32 = arith.constant 0 : i32
    %c0_i32_0 = arith.constant 0 : i32
    %c0_i32_1 = arith.constant 0 : i32
    return %arg0, %c0_i32, %c0_i32_0 : i32, i32, i32
  }
  func.func @transform_4(%arg0: i32, %arg1: i32) -> (i32, i32, i32) {
    %c0_i32 = arith.constant 0 : i32
    %c0_i32_0 = arith.constant 0 : i32
    %c0_i32_1 = arith.constant 0 : i32
    return %arg0, %c0_i32, %c0_i32_0 : i32, i32, i32
  }
}

</mosaic_0001>

<llo_original>
// kernel: tpu_custom_call.1
$region0: #{tpu_custom_call.1}
  #allocation0 [shape = 'u32[]', space=smem, size = 0x4, offset = 0x4, fixed_abs, tag = 'smem constant byte address 0x4 - core index']
  #allocation1 [shape = 'u32[144,128]{1,0:T(1,128)}', space=vmem, size = 0x12000, scoped, tag = 'internal scratch']
  %s0 = inlined_call_operand.hbm [shape: f32[2,4,1,256], index: 0, kind: input, shape index: {}]
  %s1 = inlined_call_operand.hbm [shape: f32[2,4,1,256], index: 1, kind: input, shape index: {}]
  %s2 = inlined_call_operand.hbm [shape: f32[4,1,256], index: 2, kind: output, shape index: {0}]
  %s3 = inlined_call_operand.hbm [shape: f32[4,1,256], index: 3, kind: output, shape index: {1}]
  %s4 = inlined_call_operand.hbm [shape: f32[4,1,256], index: 4, kind: output, shape index: {2}]
  %5 = xla_tuple %s2, %s3, %s4
  %s6 = sld [smem:[#allocation0]]
  $region69: #{tpu_custom_call.1} parent=0
    _
  %s8 = ssub.s32 1, %s6
  %s9 = scalar_select 0, %s8, %s6
  $region1: #{tpu_custom_call.1} parent=0
    #allocation2 [shape = 'u8[4096]{0}', space=vmem, size = 0x1000, scoped, tag = 'input window, operand 0']
    #allocation3 [shape = 's32[2]{0}', space=sflag, size = 0x8, scoped, tag = 'scoped memory for tpu_custom_call.1']
    #allocation4 [shape = 's32[2]{0}', space=sflag, size = 0x8, scoped, tag = 'scoped memory for tpu_custom_call.1']
    #allocation5 [shape = 'u8[4096]{0}', space=vmem, size = 0x1000, scoped, tag = 'input window, operand 1']
    #allocation6 [shape = 's32[2]{0}', space=sflag, size = 0x8, scoped, tag = 'scoped memory for tpu_custom_call.1']
    #allocation7 [shape = 'u8[2048]{0}', space=vmem, size = 0x800, scoped, tag = 'output window, operand 0']
    #allocation8 [shape = 'u8[2048]{0}', space=vmem, size = 0x800, scoped, tag = 'output window, operand 1']
    #allocation9 [shape = 's32[2]{0}', space=sflag, size = 0x8, scoped, tag = 'scoped memory for tpu_custom_call.1']
    #allocation10 [shape = 'u8[2048]{0}', space=vmem, size = 0x800, scoped, tag = 'output window, operand 2']
    %10 = vsyncpa [#allocation3], 0
    %s11 = scalar_lea.sflag [#allocation3], 1
    %12 = vsyncpa %s11, 0
    %13 = vsyncpa [#allocation6], 0
    %s14 = scalar_lea.sflag [#allocation6], 1
    %15 = vsyncpa %s14, 0
    %16 = vsyncpa [#allocation4], 0
    %s17 = scalar_lea.sflag [#allocation4], 1
    %18 = vsyncpa %s17, 0
    %19 = vsyncpa [#allocation9], 0
    %s20 = scalar_lea.sflag [#allocation9], 1
    %21 = vsyncpa %s20, 0
    loop: start=0, step=1, limit=6
    $region2: #{tpu_custom_call.1} parent=1 // loop_pre_header
      _
    $region3: #{tpu_custom_call.1} parent=1 // loop_header
      %s23 = sphi 0, %s27
      %p24 = scmp.ge.s32.totalorder %s23, 6
      %s30 = sphi 0, %s42
      %s31 = sphi 0, %s38
      %s32 = sphi 0, %s30
      %s33 = sphi 0, %s31
      %s34 = sphi 0, %s32
      %s35 = sphi 0, %s33
      %s47 = sphi 0, %s49
      %s50 = sphi 0, %s47
      %s51 = sphi 0, %s50
      %s67 = sphi 0, %s51
      %s75 = sphi 0, %s77
      %s78 = sphi 0, %s75
      %s79 = sphi 0, %s78
      %s95 = sphi 0, %s79
      %s101 = sphi 0, %s103
      %s104 = sphi 0, %s101
      %s105 = sphi 0, %s104
      %s121 = sphi 0, %s105
      %s127 = sphi 0, %s129
      %s130 = sphi 0, %s127
      %s131 = sphi 0, %s130
      %s147 = sphi 0, %s131
      %s153 = sphi 0, %s155
      %s156 = sphi 0, %s153
      %s157 = sphi 0, %s156
      %s173 = sphi 0, %s157
    $region4: #{tpu_custom_call.1} parent=1 // loop_header_branch
      %26 = sbr.rel (%p24) target = $region8
    $region5: #{tpu_custom_call.1} parent=1 // loop_body
      %s28 = ssub.s32 %s23, 1
      %s29 = ssub.s32 %s23, 2
      %s36 = sadd.s32 1, %s31
      %p37 = scmp.ge.s32.totalorder %s36, 1
      %s38 = scalar_select %p37, 0, %s36
      %s39 = sadd.s32 1, %s30
      %s40 = scalar_select %p37, %s39, %s30
      %p41 = scmp.ge.s32.totalorder %s40, 4
      %s42 = scalar_select %p41, 0, %s40
      %s43 = ssub.s32 %s30, %s42
      %s44 = ssub.s32 %s31, %s38
      %s45 = sor.u32 %s43, %s44
      %p46 = scmp.eq.s32.totalorder %s45, 0
      %s48 = sadd.s32 %s47, 1
      %s49 = scalar_select %p46, %s47, %s48
      %p52 = pneg %p46
      %p53 = scmp.eq.s32.totalorder %s23, 3
      %p54 = por %p52, %p53
      %p55 = scmp.ne.s32.totalorder %s47, %s50
      %p56 = scmp.eq.s32.totalorder %s23, 0
      %p57 = por %p55, %p56
      %p58 = scmp.ne.s32.totalorder %s47, %s50
      %p59 = scmp.eq.s32.totalorder %s28, 3
      %p60 = por %p58, %p59
      %p61 = scmp.ne.s32.totalorder %s50, %s51
      %p62 = scmp.eq.s32.totalorder %s28, 0
      %p63 = por %p61, %p62
      %p64 = scmp.ne.s32.totalorder %s50, %s51
      %p65 = scmp.eq.s32.totalorder %s29, 3
      %p66 = por %p64, %p65
      %p68 = scmp.ne.s32.totalorder %s51, %s67
      %p69 = scmp.eq.s32.totalorder %s29, 0
      %p70 = por %p68, %p69
      %s71 = ssub.s32 %s30, %s42
      %s72 = ssub.s32 %s31, %s38
      %s73 = sor.u32 %s71, %s72
      %p74 = scmp.eq.s32.totalorder %s73, 0
      %s76 = sadd.s32 %s75, 1
      %s77 = scalar_select %p74, %s75, %s76
      %p80 = pneg %p74
      %p81 = scmp.eq.s32.totalorder %s23, 3
      %p82 = por %p80, %p81
      %p83 = scmp.ne.s32.totalorder %s75, %s78
      %p84 = scmp.eq.s32.totalorder %s23, 0
      %p85 = por %p83, %p84
      %p86 = scmp.ne.s32.totalorder %s75, %s78
      %p87 = scmp.eq.s32.totalorder %s28, 3
      %p88 = por %p86, %p87
      %p89 = scmp.ne.s32.totalorder %s78, %s79
      %p90 = scmp.eq.s32.totalorder %s28, 0
      %p91 = por %p89, %p90
      %p92 = scmp.ne.s32.totalorder %s78, %s79
      %p93 = scmp.eq.s32.totalorder %s29, 3
      %p94 = por %p92, %p93
      %p96 = scmp.ne.s32.totalorder %s79, %s95
      %p97 = scmp.eq.s32.totalorder %s29, 0
      %p98 = por %p96, %p97
      %s99 = ssub.s32 %s30, %s42
      %p100 = scmp.eq.s32.totalorder %s99, 0
      %s102 = sadd.s32 %s101, 1
      %s103 = scalar_select %p100, %s101, %s102
      %p106 = pneg %p100
      %p107 = scmp.eq.s32.totalorder %s23, 3
      %p108 = por %p106, %p107
      %p109 = scmp.ne.s32.totalorder %s101, %s104
      %p110 = scmp.eq.s32.totalorder %s23, 0
      %p111 = por %p109, %p110
      %p112 = scmp.ne.s32.totalorder %s101, %s104
      %p113 = scmp.eq.s32.totalorder %s28, 3
      %p114 = por %p112, %p113
      %p115 = scmp.ne.s32.totalorder %s104, %s105
      %p116 = scmp.eq.s32.totalorder %s28, 0
      %p117 = por %p115, %p116
      %p118 = scmp.ne.s32.totalorder %s104, %s105
      %p119 = scmp.eq.s32.totalorder %s29, 3
      %p120 = por %p118, %p119
      %p122 = scmp.ne.s32.totalorder %s105, %s121
      %p123 = scmp.eq.s32.totalorder %s29, 0
      %p124 = por %p122, %p123
      %s125 = ssub.s32 %s30, %s42
      %p126 = scmp.eq.s32.totalorder %s125, 0
      %s128 = sadd.s32 %s127, 1
      %s129 = scalar_select %p126, %s127, %s128
      %p132 = pneg %p126
      %p133 = scmp.eq.s32.totalorder %s23, 3
      %p134 = por %p132, %p133
      %p135 = scmp.ne.s32.totalorder %s127, %s130
      %p136 = scmp.eq.s32.totalorder %s23, 0
      %p137 = por %p135, %p136
      %p138 = scmp.ne.s32.totalorder %s127, %s130
      %p139 = scmp.eq.s32.totalorder %s28, 3
      %p140 = por %p138, %p139
      %p141 = scmp.ne.s32.totalorder %s130, %s131
      %p142 = scmp.eq.s32.totalorder %s28, 0
      %p143 = por %p141, %p142
      %p144 = scmp.ne.s32.totalorder %s130, %s131
      %p145 = scmp.eq.s32.totalorder %s29, 3
      %p146 = por %p144, %p145
      %p148 = scmp.ne.s32.totalorder %s131, %s147
      %p149 = scmp.eq.s32.totalorder %s29, 0
      %p150 = por %p148, %p149
      %s151 = ssub.s32 %s30, %s42
      %p152 = scmp.eq.s32.totalorder %s151, 0
      %s154 = sadd.s32 %s153, 1
      %s155 = scalar_select %p152, %s153, %s154
      %p158 = pneg %p152
      %p159 = scmp.eq.s32.totalorder %s23, 3
      %p160 = por %p158, %p159
      %p161 = scmp.ne.s32.totalorder %s153, %s156
      %p162 = scmp.eq.s32.totalorder %s23, 0
      %p163 = por %p161, %p162
      %p164 = scmp.ne.s32.totalorder %s153, %s156
      %p165 = scmp.eq.s32.totalorder %s28, 3
      %p166 = por %p164, %p165
      %p167 = scmp.ne.s32.totalorder %s156, %s157
      %p168 = scmp.eq.s32.totalorder %s28, 0
      %p169 = por %p167, %p168
      %p170 = scmp.ne.s32.totalorder %s156, %s157
      %p171 = scmp.eq.s32.totalorder %s29, 3
      %p172 = por %p170, %p171
      %p174 = scmp.ne.s32.totalorder %s157, %s173
      %p175 = scmp.eq.s32.totalorder %s29, 0
      %p176 = por %p174, %p175
      %p177 = scmp.le.s32.totalorder 1, %s23
      %p178 = scmp.lt.s32.totalorder %s23, 5
      %p179 = pnand %p177, %p178
      %p180 = pneg %p179
      // Predicated region
      $region9: #{tpu_custom_call.1} parent=5 // pred_check
        _
      $region10: #{tpu_custom_call.1} parent=5 // pred_check_branch
        %182 = sbr.rel (%p179) target = $region12
      $region11: #{tpu_custom_call.1} parent=5 // pred_region
        %s183 = ssub.s32 %s23, 1
      $region12: #{tpu_custom_call.1} parent=5 // pred_fallthru
        _
      %p184 = scmp.lt.s32.totalorder %s23, 4
      // Predicated region
      $region13: #{tpu_custom_call.1} parent=5 // pred_check
        %p185 = pneg %p184
      $region14: #{tpu_custom_call.1} parent=5 // pred_check_branch
        %187 = sbr.rel (%p185) target = $region16
      $region15: #{tpu_custom_call.1} parent=5 // pred_region
        // Predicated region
        $region17: #{tpu_custom_call.1} parent=15 // pred_check
          %p188 = pneg %p57
        $region18: #{tpu_custom_call.1} parent=15 // pred_check_branch
          %190 = sbr.rel (%p188) target = $region20
        $region19: #{tpu_custom_call.1} parent=15 // pred_region
          %s191 = sand.u32 %s47, 1
          %s192 = scalar_lea.sflag [#allocation3], %s191
          %s193 = sand.u32 %s47, 1
          %s194 = smul.addr %s193, 4
          %s195 = scalar_lea.vmem [#allocation2], %s194
          %s197 = ssub.s32 64, 64
          %198 = vsyncadd %s192, %s197
          %s199 = smul.addr %s31, 2
          %s200 = smul.addr %s30, 2
          %s201 = sadd.s32 %s199, %s200
          %s202 = smul.addr %s201, 16
          %s203 = scalar_lea.hbm %s0, %s202
          %s204 = sshll.u32 %s195, 4
          %s205 = int_to_ptr.vmem [resolvable:$true] %s204
          %210 = dma.hbm_to_vmem [thread:$0]  %s203, 64, %s205, %s192, 128, 32, 2
        $region20: #{tpu_custom_call.1} parent=15 // pred_fallthru
          _
        // Predicated region
        $region21: #{tpu_custom_call.1} parent=15 // pred_check
          %p211 = pneg %p85
        $region22: #{tpu_custom_call.1} parent=15 // pred_check_branch
          %213 = sbr.rel (%p211) target = $region24
        $region23: #{tpu_custom_call.1} parent=15 // pred_region
          %s214 = sand.u32 %s75, 1
          %s215 = scalar_lea.sflag [#allocation6], %s214
          %s216 = sand.u32 %s75, 1
          %s217 = smul.addr %s216, 4
          %s218 = scalar_lea.vmem [#allocation5], %s217
          %s220 = ssub.s32 64, 64
          %221 = vsyncadd %s215, %s220
          %s222 = smul.addr %s31, 2
          %s223 = smul.addr %s30, 2
          %s224 = sadd.s32 %s222, %s223
          %s225 = smul.addr %s224, 16
          %s226 = scalar_lea.hbm %s1, %s225
          %s227 = sshll.u32 %s218, 4
          %s228 = int_to_ptr.vmem [resolvable:$true] %s227
          %233 = dma.hbm_to_vmem [thread:$0]  %s226, 64, %s228, %s215, 128, 32, 2
        $region24: #{tpu_custom_call.1} parent=15 // pred_fallthru
          _
      $region16: #{tpu_custom_call.1} parent=5 // pred_fallthru
        _
      %p234 = scmp.le.s32.totalorder 1, %s23
      %p235 = scmp.lt.s32.totalorder %s23, 5
      %p236 = pnand %p234, %p235
      %p237 = pneg %p236
      // Predicated region
      $region25: #{tpu_custom_call.1} parent=5 // pred_check
        _
      $region26: #{tpu_custom_call.1} parent=5 // pred_check_branch
        %239 = sbr.rel (%p236) target = $region28
      $region27: #{tpu_custom_call.1} parent=5 // pred_region
        %s240 = ssub.s32 %s23, 1
        %s241 = sand.u32 %s50, 1
        %s242 = scalar_lea.sflag [#allocation3], %s241
        %s243 = sand.u32 %s50, 1
        %s244 = smul.addr %s243, 4
        %s245 = scalar_lea.vmem [#allocation2], %s244
        // Predicated region
        $region29: #{tpu_custom_call.1} parent=27 // pred_check
          %p246 = pneg %p63
        $region30: #{tpu_custom_call.1} parent=27 // pred_check_branch
          %248 = sbr.rel (%p246) target = $region32
        $region31: #{tpu_custom_call.1} parent=27 // pred_region
          %249 = dma.done %s242, 64
        $region32: #{tpu_custom_call.1} parent=27 // pred_fallthru
          _
        %s250 = sand.u32 %s78, 1
        %s251 = scalar_lea.sflag [#allocation6], %s250
        %s252 = sand.u32 %s78, 1
        %s253 = smul.addr %s252, 4
        %s254 = scalar_lea.vmem [#allocation5], %s253
        // Predicated region
        $region33: #{tpu_custom_call.1} parent=27 // pred_check
          %p255 = pneg %p91
        $region34: #{tpu_custom_call.1} parent=27 // pred_check_branch
          %257 = sbr.rel (%p255) target = $region36
        $region35: #{tpu_custom_call.1} parent=27 // pred_region
          %258 = dma.done %s251, 64
        $region36: #{tpu_custom_call.1} parent=27 // pred_fallthru
          _
        %s259 = sand.u32 %s50, 1
        %s260 = scalar_lea.sflag [#allocation3], %s259
        %s261 = sand.u32 %s50, 1
        %s262 = smul.addr %s261, 4
        %s263 = scalar_lea.vmem [#allocation2], %s262
        %p264 = pneg %p63
        %p265 = pneg %p60
        %s266 = sand.u32 %s78, 1
        %s267 = scalar_lea.sflag [#allocation6], %s266
        %s268 = sand.u32 %s78, 1
        %s269 = smul.addr %s268, 4
        %s270 = scalar_lea.vmem [#allocation5], %s269
        %p271 = pneg %p91
        %p272 = pneg %p88
        %p273 = pneg %p117
        %p274 = pneg %p114
        %s275 = sand.u32 %s104, 1
        %s276 = scalar_lea.sflag [#allocation4], %s275
        %s277 = sand.u32 %s104, 1
        %s278 = smul.addr %s277, 2
        %s279 = scalar_lea.vmem [#allocation7], %s278
        %p280 = pneg %p143
        %p281 = pneg %p140
        %s282 = sand.u32 %s28, 1
        %s283 = scalar_lea.sflag [#allocation9], %s282
        %s284 = sand.u32 %s130, 1
        %s285 = smul.addr %s284, 2
        %s286 = scalar_lea.vmem [#allocation8], %s285
        %p287 = pneg %p169
        %p288 = pneg %p166
        %s289 = sand.u32 %s28, 1
        %s290 = scalar_lea.sflag [#allocation9], %s289
        %s291 = sand.u32 %s156, 1
        %s292 = smul.addr %s291, 2
        %s293 = scalar_lea.vmem [#allocation10], %s292
        %p294 = scmp.eq.s32.totalorder %s33, 0
        // Predicated region
        $region37: #{tpu_custom_call.1} parent=27 // pred_check
          %p295 = pneg %p294
        $region38: #{tpu_custom_call.1} parent=27 // pred_check_branch
          %297 = sbr.rel (%p295) target = $region40
        $region39: #{tpu_custom_call.1} parent=27 // pred_region
          %v298 = vlaneseq
          %vm299 = vcmp.ge.s32.totalorder %v298, 0
          %vm300 = vcmp.lt.s32.totalorder %v298, 256
          %vm301 = vmand %vm299, %vm300
          %302 = vst.msk [vmem:[%s279] sm:$0x3] %vm301, 0.0
          %303 = vst.msk [vmem:[%s286] sm:$0x3] %vm301, 0.0
          %304 = vst.msk [vmem:[%s293] sm:$0x3] %vm301, 0.0
        $region40: #{tpu_custom_call.1} parent=27 // pred_fallthru
          _
        %v305 = vld [vmem:[%s245] sm:$0x3]
        %v306 = vld [vmem:[%s245 + $0x2] sm:$0x3]
        %v307 = vld [vmem:[%s254] sm:$0x3]
        %v308 = vld [vmem:[%s254 + $0x2] sm:$0x3]
        %v309 = vsub.f32 0.0, %v305
        %v310 = vsub.f32 0.0, %v306
        %v311 = vmax.f32 %v309, 0.0
        %v312 = vmax.f32 %v310, 0.0
        %v313 = vand.u32 2147483647, %v305
        %v314 = vand.u32 2147483647, %v306
        %v315 = vsub.f32 0.0, %v313
        %v316 = vsub.f32 0.0, %v314
        %v317 = vmul.f32 %v315, 1.442695
        %v318 = vpow.pop %v317
        %v319 = vmul.f32 %v316, 1.442695
        %v320 = vpow.pop %v319
        %v321 = vadd.f32 %v318, 1.0
        %v322 = vadd.f32 %v320, 1.0
        %v323 = vlog2.pop %v321
        %v324 = vmul.f32 %v323, 0.6931472
        %v325 = vlog2.pop %v322
        %v326 = vmul.f32 %v325, 0.6931472
        %v327 = vadd.f32 %v311, %v324
        %v328 = vadd.f32 %v312, %v326
        %v329 = vmul.f32 %v305, %v307
        %v330 = vmul.f32 %v306, %v308
        %v331 = vsub.f32 %v305, %v329
        %v332 = vsub.f32 %v306, %v330
        %v333 = vadd.f32 %v331, %v327
        %v334 = vadd.f32 %v332, %v328
        %v335 = vmul.f32 %v307, %v327
        %v336 = vmul.f32 %v308, %v328
        %v337 = vld [vmem:[%s279] sm:$0x3]
        %v340 = vlaneseq
        %v341 = vshrl.u32 %v340, 7
        %v342 = vsub.s32 0, %v341
        %v343 = vrot.slane %v333, %v342
        %v344 = vlaneseq
        %v345 = vshrl.u32 %v344, 7
        %v346 = vsub.s32 1, %v345
        %v347 = vrot.slane %v333, %v346
        %v348 = vlaneseq
        %v349 = vshrl.u32 %v348, 7
        %v350 = vsub.s32 0, %v349
        %v351 = vrot.slane %v334, %v350
        %v352 = vlaneseq
        %v353 = vshrl.u32 %v352, 7
        %v354 = vsub.s32 1, %v353
        %v355 = vrot.slane %v334, %v354
        %vm360 = vcmask 1040384
        %v361 = vsel %vm360, %v343, 0.0
        %v362 = vsel %vm360, %v351, 0.0
        %v363 = vadd.f32 %v361, %v362
        %v364 = vsel %vm360, %v347, 0.0
        %v365 = vsel %vm360, %v355, 0.0
        %v366 = vadd.f32 %v364, %v365
        %v367 = vadd.f32 %v363, 0.0
        %v368 = vadd.f32 %v366, 0.0
        %v371 = vcombine.low %v367, %v368
        %v373 = vunpack.c.l.s4 1966171168
        %v374 = vunpack.c.0.s8 %v373
        %v375 = vlaneseq
        %v376 = vshrl.u32 %v375, 7
        %v377 = vsub.s32 %v374, %v376
        %v378 = vrot.slane %v371, %v377
        %v380 = vunpack.c.l.s4 1966171168
        %v381 = vunpack.c.0.s8 %v380
        %v382 = vlaneseq
        %v383 = vshrl.u32 %v382, 7
        %v384 = vsub.s32 %v381, %v383
        %v385 = vrot.slane %v378, %v384
        %v387 = vadd.f32 %v337, %v385
        %v388 = vlaneseq
        %vm389 = vcmp.ge.s32.totalorder %v388, 0
        %vm390 = vcmp.lt.s32.totalorder %v388, 256
        %vm391 = vmand %vm389, %vm390
        %392 = vst.msk [vmem:[%s279] sm:$0x3] %vm391, %v387
        %v393 = vld [vmem:[%s286] sm:$0x3]
        %v396 = vlaneseq
        %v397 = vshrl.u32 %v396, 7
        %v398 = vsub.s32 0, %v397
        %v399 = vrot.slane %v335, %v398
        %v400 = vlaneseq
        %v401 = vshrl.u32 %v400, 7
        %v402 = vsub.s32 1, %v401
        %v403 = vrot.slane %v335, %v402
        %v404 = vlaneseq
        %v405 = vshrl.u32 %v404, 7
        %v406 = vsub.s32 0, %v405
        %v407 = vrot.slane %v336, %v406
        %v408 = vlaneseq
        %v409 = vshrl.u32 %v408, 7
        %v410 = vsub.s32 1, %v409
        %v411 = vrot.slane %v336, %v410
        %v416 = vsel %vm360, %v399, 0.0
        %v417 = vsel %vm360, %v407, 0.0
        %v418 = vadd.f32 %v416, %v417
        %v419 = vsel %vm360, %v403, 0.0
        %v420 = vsel %vm360, %v411, 0.0
        %v421 = vadd.f32 %v419, %v420
        %v422 = vadd.f32 %v418, 0.0
        %v423 = vadd.f32 %v421, 0.0
        %v426 = vcombine.low %v422, %v423
        %v428 = vunpack.c.l.s4 1966171168
        %v429 = vunpack.c.0.s8 %v428
        %v430 = vlaneseq
        %v431 = vshrl.u32 %v430, 7
        %v432 = vsub.s32 %v429, %v431
        %v433 = vrot.slane %v426, %v432
        %v435 = vunpack.c.l.s4 1966171168
        %v436 = vunpack.c.0.s8 %v435
        %v437 = vlaneseq
        %v438 = vshrl.u32 %v437, 7
        %v439 = vsub.s32 %v436, %v438
        %v440 = vrot.slane %v433, %v439
        %v442 = vadd.f32 %v393, %v440
        %443 = vst.msk [vmem:[%s286] sm:$0x3] %vm391, %v442
        %v444 = vld [vmem:[%s293] sm:$0x3]
        %v447 = vlaneseq
        %v448 = vshrl.u32 %v447, 7
        %v449 = vsub.s32 0, %v448
        %v450 = vrot.slane %v307, %v449
        %v451 = vlaneseq
        %v452 = vshrl.u32 %v451, 7
        %v453 = vsub.s32 1, %v452
        %v454 = vrot.slane %v307, %v453
        %v455 = vlaneseq
        %v456 = vshrl.u32 %v455, 7
        %v457 = vsub.s32 0, %v456
        %v458 = vrot.slane %v308, %v457
        %v459 = vlaneseq
        %v460 = vshrl.u32 %v459, 7
        %v461 = vsub.s32 1, %v460
        %v462 = vrot.slane %v308, %v461
        %v467 = vsel %vm360, %v450, 0.0
        %v468 = vsel %vm360, %v458, 0.0
        %v469 = vadd.f32 %v467, %v468
        %v470 = vsel %vm360, %v454, 0.0
        %v471 = vsel %vm360, %v462, 0.0
        %v472 = vadd.f32 %v470, %v471
        %v473 = vadd.f32 %v469, 0.0
        %v474 = vadd.f32 %v472, 0.0
        %v477 = vcombine.low %v473, %v474
        %v479 = vunpack.c.l.s4 1966171168
        %v480 = vunpack.c.0.s8 %v479
        %v481 = vlaneseq
        %v482 = vshrl.u32 %v481, 7
        %v483 = vsub.s32 %v480, %v482
        %v484 = vrot.slane %v477, %v483
        %v486 = vunpack.c.l.s4 1966171168
        %v487 = vunpack.c.0.s8 %v486
        %v488 = vlaneseq
        %v489 = vshrl.u32 %v488, 7
        %v490 = vsub.s32 %v487, %v489
        %v491 = vrot.slane %v484, %v490
        %v493 = vadd.f32 %v444, %v491
        %494 = vst.msk [vmem:[%s293] sm:$0x3] %vm391, %v493
        %s495 = sand.u32 %s104, 1
        %s496 = scalar_lea.sflag [#allocation4], %s495
        %s497 = sand.u32 %s104, 1
        %s498 = smul.addr %s497, 2
        %s499 = scalar_lea.vmem [#allocation7], %s498
        %s500 = sand.u32 %s28, 1
        %s501 = scalar_lea.sflag [#allocation9], %s500
        %s502 = sand.u32 %s130, 1
        %s503 = smul.addr %s502, 2
        %s504 = scalar_lea.vmem [#allocation8], %s503
        %s505 = sand.u32 %s28, 1
        %s506 = scalar_lea.sflag [#allocation9], %s505
        %s507 = sand.u32 %s156, 1
        %s508 = smul.addr %s507, 2
        %s509 = scalar_lea.vmem [#allocation10], %s508
        // Predicated region
        $region41: #{tpu_custom_call.1} parent=27 // pred_check
          %p510 = pneg %p114
        $region42: #{tpu_custom_call.1} parent=27 // pred_check_branch
          %512 = sbr.rel (%p510) target = $region44
        $region43: #{tpu_custom_call.1} parent=27 // pred_region
          %s514 = ssub.s32 32, 32
          %515 = vsyncadd %s496, %s514
          %s516 = smul.addr %s32, 2
          %s517 = smul.addr %s516, 16
          %s518 = scalar_lea.hbm %s2, %s517
          %s520 = sshll.u32 %s499, 4
          %s521 = int_to_ptr.vmem [resolvable:$true] %s520
          %523 = dma.vmem_to_hbm [thread:$0]  %s521, 32, %s518, %s496
        $region44: #{tpu_custom_call.1} parent=27 // pred_fallthru
          _
        // Predicated region
        $region45: #{tpu_custom_call.1} parent=27 // pred_check
          %p524 = pneg %p140
        $region46: #{tpu_custom_call.1} parent=27 // pred_check_branch
          %526 = sbr.rel (%p524) target = $region48
        $region47: #{tpu_custom_call.1} parent=27 // pred_region
          %s528 = ssub.s32 32, 32
          %529 = vsyncadd %s501, %s528
          %s530 = smul.addr %s32, 2
          %s531 = smul.addr %s530, 16
          %s532 = scalar_lea.hbm %s3, %s531
          %s534 = sshll.u32 %s504, 4
          %s535 = int_to_ptr.vmem [resolvable:$true] %s534
          %537 = dma.vmem_to_hbm [thread:$0]  %s535, 32, %s532, %s501
        $region48: #{tpu_custom_call.1} parent=27 // pred_fallthru
          _
        // Predicated region
        $region49: #{tpu_custom_call.1} parent=27 // pred_check
          %p538 = pneg %p166
        $region50: #{tpu_custom_call.1} parent=27 // pred_check_branch
          %540 = sbr.rel (%p538) target = $region52
        $region51: #{tpu_custom_call.1} parent=27 // pred_region
          %s542 = ssub.s32 32, 32
          %543 = vsyncadd %s506, %s542
          %s544 = smul.addr %s32, 2
          %s545 = smul.addr %s544, 16
          %s546 = scalar_lea.hbm %s4, %s545
          %s548 = sshll.u32 %s509, 4
          %s549 = int_to_ptr.vmem [resolvable:$true] %s548
          %551 = dma.vmem_to_hbm [thread:$0]  %s549, 32, %s546, %s506
        $region52: #{tpu_custom_call.1} parent=27 // pred_fallthru
          _
      $region28: #{tpu_custom_call.1} parent=5 // pred_fallthru
        _
      %p552 = scmp.le.s32.totalorder 2, %s23
      // Predicated region
      $region53: #{tpu_custom_call.1} parent=5 // pred_check
        %p553 = pneg %p552
      $region54: #{tpu_custom_call.1} parent=5 // pred_check_branch
        %555 = sbr.rel (%p553) target = $region56
      $region55: #{tpu_custom_call.1} parent=5 // pred_region
        %s556 = ssub.s32 %s23, 2
        // Predicated region
        $region57: #{tpu_custom_call.1} parent=55 // pred_check
          %p557 = pneg %p120
        $region58: #{tpu_custom_call.1} parent=55 // pred_check_branch
          %559 = sbr.rel (%p557) target = $region60
        $region59: #{tpu_custom_call.1} parent=55 // pred_region
          %s560 = sand.u32 %s105, 1
          %s561 = scalar_lea.sflag [#allocation4], %s560
          %s562 = sand.u32 %s105, 1
          %s563 = smul.addr %s562, 2
          %s564 = scalar_lea.vmem [#allocation7], %s563
          %565 = dma.done %s561, 32
        $region60: #{tpu_custom_call.1} parent=55 // pred_fallthru
          _
        // Predicated region
        $region61: #{tpu_custom_call.1} parent=55 // pred_check
          %p566 = pneg %p146
        $region62: #{tpu_custom_call.1} parent=55 // pred_check_branch
          %568 = sbr.rel (%p566) target = $region64
        $region63: #{tpu_custom_call.1} parent=55 // pred_region
          %s569 = sand.u32 %s29, 1
          %s570 = scalar_lea.sflag [#allocation9], %s569
          %s571 = sand.u32 %s131, 1
          %s572 = smul.addr %s571, 2
          %s573 = scalar_lea.vmem [#allocation8], %s572
          %574 = dma.done %s570, 32
        $region64: #{tpu_custom_call.1} parent=55 // pred_fallthru
          _
        // Predicated region
        $region65: #{tpu_custom_call.1} parent=55 // pred_check
          %p575 = pneg %p172
        $region66: #{tpu_custom_call.1} parent=55 // pred_check_branch
          %577 = sbr.rel (%p575) target = $region68
        $region67: #{tpu_custom_call.1} parent=55 // pred_region
          %s578 = sand.u32 %s29, 1
          %s579 = scalar_lea.sflag [#allocation9], %s578
          %s580 = sand.u32 %s157, 1
          %s581 = smul.addr %s580, 2
          %s582 = scalar_lea.vmem [#allocation10], %s581
          %583 = dma.done %s579, 32
        $region68: #{tpu_custom_call.1} parent=55 // pred_fallthru
          _
      $region56: #{tpu_custom_call.1} parent=5 // pred_fallthru
        _
    $region6: #{tpu_custom_call.1} parent=1 // loop_footer
      %s27 = sadd.s32 1, %s23
    $region7: #{tpu_custom_call.1} parent=1 // loop_footer_branch
      %22 = sbr.rel target = $region3
    $region8: #{tpu_custom_call.1} parent=1 // loop_exit
      _
    %584 = vsyncpa [#allocation3], 1
    %s585 = scalar_lea.sflag [#allocation3], 1
    %586 = vsyncpa %s585, 1
    %587 = vsyncpa [#allocation6], 1
    %s588 = scalar_lea.sflag [#allocation6], 1
    %589 = vsyncpa %s588, 1
    %590 = vsyncpa [#allocation4], 1
    %s591 = scalar_lea.sflag [#allocation4], 1
    %592 = vsyncpa %s591, 1
    %593 = vsyncpa [#allocation9], 1
    %s594 = scalar_lea.sflag [#allocation9], 1
    %595 = vsyncpa %s594, 1

</llo_original>
